<compile_context>
chip_gen: v6e
topology: v6e:2x2x1
jax: 0.10.0
libtpu: 0.0.40
codegen_flags: <defaults>
</compile_context>

<pallas_src>
from math import sqrt

import jax
import jax.numpy as jnp
from jax import lax
from jax.experimental import pallas as pl
from jax.experimental.pallas import tpu as pltpu

_NEG_INF = -1e30


def _pick_tile(dim, target, quantum):
    """Largest tile <= target that divides `dim` and is a multiple of `quantum`.
    Falls back to the full dim (always satisfies the (8,128) block rule)."""
    if dim <= target:
        return dim
    t = (target // quantum) * quantum
    while t >= quantum:
        if dim % t == 0:
            return t
        t -= quantum
    return dim


# ---------------------------------------------------------------------------
# Tiled (batched) linear:  y[g] = x[g] @ W[g]^T + b[g]
# grid = (G, M/tm, N/tn, K/tk), f32 accumulator scratch, bf16 MXU operands.
# ---------------------------------------------------------------------------
def _linear_kernel(x_ref, wt_ref, b_ref, o_ref, acc_ref):
    @pl.when(pl.program_id(3) == 0)
    def _():
        acc_ref[...] = jnp.zeros_like(acc_ref)

    acc_ref[...] += jnp.dot(x_ref[0], wt_ref[0],
                            preferred_element_type=jnp.float32)

    @pl.when(pl.program_id(3) == pl.num_programs(3) - 1)
    def _():
        o_ref[0] = (acc_ref[...] + b_ref[0]).astype(o_ref.dtype)


def pallas_batched_linear(x, w, b, *, out_dtype=jnp.float32,
                          tm=256, tn=256, tk=512):
    """x: (G, M, K); w: (G, N, K) PyTorch layout; b: (G, N) -> (G, M, N)."""
    G, M, K = x.shape
    N = w.shape[1]
    tm = _pick_tile(M, tm, 8)
    tn = _pick_tile(N, tn, 128)
    tk = _pick_tile(K, tk, 128)

    xb = x.astype(jnp.bfloat16)
    wt = jnp.swapaxes(w, 1, 2).astype(jnp.bfloat16)          # (G, K, N)
    b2 = b.reshape(G, 1, N).astype(jnp.float32)

    grid = (G, M // tm, N // tn, K // tk)
    return pl.pallas_call(
        _linear_kernel,
        out_shape=jax.ShapeDtypeStruct((G, M, N), out_dtype),
        grid_spec=pltpu.PrefetchScalarGridSpec(
            num_scalar_prefetch=0,
            grid=grid,
            in_specs=[
                pl.BlockSpec((1, tm, tk), lambda g, i, j, k: (g, i, k)),
                pl.BlockSpec((1, tk, tn), lambda g, i, j, k: (g, k, j)),
                pl.BlockSpec((1, 1, tn), lambda g, i, j, k: (g, 0, j)),
            ],
            out_specs=pl.BlockSpec((1, tm, tn), lambda g, i, j, k: (g, i, j)),
            scratch_shapes=[pltpu.VMEM((tm, tn), jnp.float32)],
        ),
        compiler_params=pltpu.CompilerParams(
            dimension_semantics=("parallel", "parallel", "parallel", "arbitrary")),
    )(xb, wt, b2)


def pallas_linear(x, w, b, *, out_dtype=jnp.float32, **kw):
    """x: (M, K); w: (N, K) PyTorch layout; b: (N,) -> (M, N)."""
    return pallas_batched_linear(x[None], w[None], b[None],
                                 out_dtype=out_dtype, **kw)[0]


# ---------------------------------------------------------------------------
# Flash-style attention (no weights output): grid = (B*H, Lq tiles, KV tiles)
# Online softmax with m/l/acc VMEM scratch.  q is pre-scaled (scale folded
# into the q projection).
# ---------------------------------------------------------------------------
def _flash_attn_kernel(q_ref, k_ref, v_ref, mask_ref, o_ref,
                       m_sc, l_sc, acc_sc):
    ki = pl.program_id(2)

    @pl.when(ki == 0)
    def _():
        m_sc[...] = jnp.full_like(m_sc, _NEG_INF)
        l_sc[...] = jnp.zeros_like(l_sc)
        acc_sc[...] = jnp.zeros_like(acc_sc)

    q = q_ref[0]                                   # (tq, D)  bf16
    k = k_ref[0]                                   # (tkv, D) bf16
    s = lax.dot_general(q, k, (((1,), (1,)), ((), ())),
                        preferred_element_type=jnp.float32)
    s = s + mask_ref[...]                          # additive mask, f32

    m_new = jnp.maximum(m_sc[...], jnp.max(s, axis=-1, keepdims=True))
    alpha = jnp.exp(m_sc[...] - m_new)
    p = jnp.exp(s - m_new)
    l_sc[...] = alpha * l_sc[...] + jnp.sum(p, axis=-1, keepdims=True)
    acc_sc[...] = alpha * acc_sc[...] + jnp.dot(
        p.astype(v_ref.dtype), v_ref[0], preferred_element_type=jnp.float32)
    m_sc[...] = m_new

    @pl.when(ki == pl.num_programs(2) - 1)
    def _():
        inv = pl.reciprocal(l_sc[...], approx=True)
        o_ref[0] = (acc_sc[...] * inv).astype(o_ref.dtype)


def pallas_flash_attention(q, k, v, attn_mask, *, tq=128, tkv=128):
    """q: (BH, L, Dq); k/v: (BH, S, Dq/Dv); attn_mask: (L, S) additive."""
    BH, L, Dq = q.shape
    S, Dv = k.shape[1], v.shape[2]
    tq = _pick_tile(L, tq, 8)
    tkv = _pick_tile(S, tkv, 128)
    mask = attn_mask.astype(jnp.float32)
    return pl.pallas_call(
        _flash_attn_kernel,
        out_shape=jax.ShapeDtypeStruct((BH, L, Dv), q.dtype),
        grid_spec=pltpu.PrefetchScalarGridSpec(
            num_scalar_prefetch=0,
            grid=(BH, L // tq, S // tkv),
            in_specs=[
                pl.BlockSpec((1, tq, Dq), lambda b, qi, ki: (b, qi, 0)),
                pl.BlockSpec((1, tkv, Dq), lambda b, qi, ki: (b, ki, 0)),
                pl.BlockSpec((1, tkv, Dv), lambda b, qi, ki: (b, ki, 0)),
                pl.BlockSpec((tq, tkv), lambda b, qi, ki: (qi, ki)),
            ],
            out_specs=pl.BlockSpec((1, tq, Dv), lambda b, qi, ki: (b, qi, 0)),
            scratch_shapes=[
                pltpu.VMEM((tq, 1), jnp.float32),   # running max
                pltpu.VMEM((tq, 1), jnp.float32),   # running sum
                pltpu.VMEM((tq, Dv), jnp.float32),  # accumulator
            ],
        ),
        compiler_params=pltpu.CompilerParams(
            dimension_semantics=("parallel", "parallel", "arbitrary")),
    )(q, k, v, mask)


# ---------------------------------------------------------------------------
# Attention that also returns the probabilities (module contract).
# q-tiled; weights emitted in bf16 to halve HBM writeback.
# ---------------------------------------------------------------------------
def _attn_weights_kernel(q_ref, k_ref, v_ref, mask_ref, o_ref, a_ref):
    q = q_ref[0]                                   # (tq, D) bf16, pre-scaled
    k = k_ref[0]                                   # (S, D)  bf16
    s = lax.dot_general(q, k, (((1,), (1,)), ((), ())),
                        preferred_element_type=jnp.float32)
    s = s + mask_ref[...]

    m = jnp.max(s, axis=-1, keepdims=True)
    p = jnp.exp(s - m)
    l = jnp.sum(p, axis=-1, keepdims=True)
    o = jnp.dot(p.astype(v_ref.dtype), v_ref[0],
                preferred_element_type=jnp.float32)
    inv = pl.reciprocal(l, approx=True)
    o_ref[0] = (o * inv).astype(o_ref.dtype)
    a_ref[0] = (p * inv).astype(a_ref.dtype)


def pallas_attention_with_weights(q, k, v, attn_mask, *, tq=128):
    BH, L, Dq = q.shape
    S, Dv = k.shape[1], v.shape[2]
    tq = _pick_tile(L, tq, 8)
    mask = attn_mask.astype(jnp.float32)
    return pl.pallas_call(
        _attn_weights_kernel,
        out_shape=(
            jax.ShapeDtypeStruct((BH, L, Dv), q.dtype),
            jax.ShapeDtypeStruct((BH, L, S), q.dtype),     # bf16 weights
        ),
        grid_spec=pltpu.PrefetchScalarGridSpec(
            num_scalar_prefetch=0,
            grid=(BH, L // tq),
            in_specs=[
                pl.BlockSpec((1, tq, Dq), lambda b, qi: (b, qi, 0)),
                pl.BlockSpec((1, S, Dq), lambda b, qi: (b, 0, 0)),
                pl.BlockSpec((1, S, Dv), lambda b, qi: (b, 0, 0)),
                pl.BlockSpec((tq, S), lambda b, qi: (qi, 0)),
            ],
            out_specs=(
                pl.BlockSpec((1, tq, Dv), lambda b, qi: (b, qi, 0)),
                pl.BlockSpec((1, tq, S), lambda b, qi: (b, qi, 0)),
            ),
        ),
        compiler_params=pltpu.CompilerParams(
            dimension_semantics=("parallel", "parallel")),
    )(q, k, v, mask)


# ---------------------------------------------------------------------------
# AttentionLayer forward
# ---------------------------------------------------------------------------
def init_attention_layer_params(key, d_model, d_qk, d_v, n_heads):
    """PyTorch-style Linear init: U(-1/sqrt(fan_in), 1/sqrt(fan_in))."""
    def lin(key, d_out, d_in):
        kw, kb = jax.random.split(key)
        bound = 1.0 / sqrt(d_in)
        w = jax.random.uniform(kw, (d_out, d_in), jnp.float32, -bound, bound)
        b = jax.random.uniform(kb, (d_out,), jnp.float32, -bound, bound)
        return w, b

    k1, k2, k3, k4 = jax.random.split(key, 4)
    return {
        "q_proj": lin(k1, d_qk * n_heads, d_model),
        "k_proj": lin(k2, d_qk * n_heads, d_model),
        "v_proj": lin(k3, d_v * n_heads, d_model),
        "out_proj": lin(k4, d_model, d_v * n_heads),
    }


def attention_layer_forward(params, queries, keys, values, attn_mask, n_heads,
                            *, need_weights=True):
    """queries: (B,L,d_model); keys/values: (B,S,d_model); attn_mask: (L,S) additive.
    need_weights=True matches the PyTorch module (returns (out, attn));
    need_weights=False is the flash-style hot path (returns (out, None))."""
    B, L, d_model = queries.shape
    S = keys.shape[1]
    H = n_heads

    wq, bq = params["q_proj"]
    wk, bk = params["k_proj"]
    wv, bv = params["v_proj"]
    wo, bo = params["out_proj"]
    d_qk = wq.shape[0] // H
    d_v = wv.shape[0] // H

    # Fold the 1/sqrt(d) score scale into the q projection (free scaling).
    scale = 1.0 / sqrt(d_qk)
    wq_s, bq_s = wq * scale, bq * scale

    # dropout_qkv p=0.0 -> identity.  TODO(synk): train-mode dropout not implemented.
    if L == S and wq.shape == wk.shape == wv.shape:
        # Fused QKV: one pallas_call over 3 stacked matmuls.
        xs = jnp.stack([queries.reshape(B * L, d_model),
                        keys.reshape(B * S, d_model),
                        values.reshape(B * S, d_model)])
        ws = jnp.stack([wq_s, wk, wv])
        bs = jnp.stack([bq_s, bk, bv])
        qkv = pallas_batched_linear(xs, ws, bs, out_dtype=jnp.bfloat16)
        q, k, v = qkv[0], qkv[1], qkv[2]
    else:
        q = pallas_linear(queries.reshape(B * L, d_model), wq_s, bq_s,
                          out_dtype=jnp.bfloat16)
        k = pallas_linear(keys.reshape(B * S, d_model), wk, bk,
                          out_dtype=jnp.bfloat16)
        v = pallas_linear(values.reshape(B * S, d_model), wv, bv,
                          out_dtype=jnp.bfloat16)

    # Head-major (B*H, L, D) layout; B*H is a single parallel grid axis so both
    # v7x TensorCores get work even when B or H is 1.
    # TODO(synk): for d_qk >= 128 the attention BlockSpecs could index the
    # (B, L, H*D) layout directly and skip these transposes.
    q = q.reshape(B, L, H, d_qk).transpose(0, 2, 1, 3).reshape(B * H, L, d_qk)
    k = k.reshape(B, S, H, d_qk).transpose(0, 2, 1, 3).reshape(B * H, S, d_qk)
    v = v.reshape(B, S, H, d_v).transpose(0, 2, 1, 3).reshape(B * H, S, d_v)

    if need_weights:
        out, attn = pallas_attention_with_weights(q, k, v, attn_mask)
        attn = attn.reshape(B, H, L, S)
    else:
        out = pallas_flash_attention(q, k, v, attn_mask)
        attn = None

    # 'batch len heads dim -> batch len (heads dim)', then out projection.
    out = out.reshape(B, H, L, d_v).transpose(0, 2, 1, 3).reshape(B * L, H * d_v)
    out = pallas_linear(out, wo, bo, out_dtype=jnp.float32).reshape(B, L, d_model)
    return out, attn


# ---------------------------------------------------------------------------
# Pure-JAX f32 reference (sanity check)
# ---------------------------------------------------------------------------
def reference_forward(params, queries, keys, values, attn_mask, n_heads):
    B, L, d_model = queries.shape
    S = keys.shape[1]
    H = n_heads

    def lin(x, w, b):
        return x @ w.T + b

    q = lin(queries, *params["q_proj"]).reshape(B, L, H, -1)
    k = lin(keys, *params["k_proj"]).reshape(B, S, H, -1)
    v = lin(values, *params["v_proj"]).reshape(B, S, H, -1)
    D = q.shape[-1]
    scores = jnp.einsum("blhd,bshd->bhls", q, k) / sqrt(D) + attn_mask[None, None]
    attn = jax.nn.softmax(scores, axis=-1)
    out = jnp.einsum("bhls,bshd->blhd", attn, v)
    out = out.reshape(B, L, -1)
    out = lin(out, *params["out_proj"])
    return out, attn


if __name__ == "__main__":
    B, L, S = 2, 8, 8
    d_model, n_heads = 32, 2
    d_qk = d_v = 16

    root = jax.random.PRNGKey(0)
    kp, kq, kk, kv = jax.random.split(root, 4)

    params = init_attention_layer_params(kp, d_model, d_qk, d_v, n_heads)
    queries = jax.random.normal(kq, (B, L, d_model), jnp.float32)
    keys = jax.random.normal(kk, (B, S, d_model), jnp.float32)
    values = jax.random.normal(kv, (B, S, d_model), jnp.float32)
    attn_mask = jnp.zeros((L, S), jnp.float32)   # additive mask (0 = unmasked)

    # Path matching the PyTorch module (returns attention weights too).
    out, attn = attention_layer_forward(params, queries, keys, values,
                                        attn_mask, n_heads, need_weights=True)
    out = jax.block_until_ready(out)
    attn = jax.block_until_ready(attn)

    # Flash-style hot path (no weights materialized).
    out_fast, _ = attention_layer_forward(params, queries, keys, values,
                                          attn_mask, n_heads, need_weights=False)
    out_fast = jax.block_until_ready(out_fast)

    ref_out, ref_attn = reference_forward(params, queries, keys, values,
                                          attn_mask, n_heads)

    assert out.shape == (B, L, d_model) and attn.shape == (B, n_heads, L, S)
    # bf16 matmul operands + approx reciprocal -> loosened tolerances vs f32 ref.
    assert jnp.allclose(out, ref_out, atol=5e-2, rtol=5e-2), \
        float(jnp.max(jnp.abs(out - ref_out)))
    assert jnp.allclose(attn.astype(jnp.float32), ref_attn, atol=2e-2, rtol=2e-2), \
        float(jnp.max(jnp.abs(attn.astype(jnp.float32) - ref_attn)))
    assert jnp.allclose(out_fast, out, atol=2e-2, rtol=2e-2), \
        float(jnp.max(jnp.abs(out_fast - out)))

    print("KERNEL_OK")
</pallas_src>

<mosaic_0001>
module attributes {stable_mosaic.version = 11 : i64} {
  func.func @_linear_kernel(%arg0: i32, %arg1: i32, %arg2: i32, %arg3: i32, %arg4: memref<1x16x32xbf16, #tpu.memory_space<vmem>>, %arg5: memref<1x32x32xbf16, #tpu.memory_space<vmem>>, %arg6: memref<1x1x32xf32, #tpu.memory_space<vmem>>, %arg7: memref<1x16x32xbf16, #tpu.memory_space<vmem>>, %arg8: memref<16x32xf32, #tpu.memory_space<vmem>>) attributes {dimension_semantics = [#tpu.dimension_semantics<parallel>, #tpu.dimension_semantics<parallel>, #tpu.dimension_semantics<parallel>, #tpu.dimension_semantics<arbitrary>], iteration_bounds = array<i64: 3, 1, 1, 1>, scalar_prefetch = 0 : i64, scratch_operands = 1 : i64, tpu.core_type = #tpu.core_type<tc>, window_params = [{transform_indices = @transform_0, window_bounds = array<i64: 1, 16, 32>}, {transform_indices = @transform_1, window_bounds = array<i64: 1, 32, 32>}, {transform_indices = @transform_2, window_bounds = array<i64: 1, 1, 32>}, {transform_indices = @transform_3, window_bounds = array<i64: 1, 16, 32>}]} {
    %c0_i32 = arith.constant 0 : i32
    %0 = arith.cmpi eq, %arg3, %c0_i32 : i32
    %1 = arith.extui %0 : i1 to i32
    %c0_i32_0 = arith.constant 0 : i32
    %2 = arith.cmpi ne, %1, %c0_i32_0 : i32
    scf.if %2 {
      %cst_12 = arith.constant 0.000000e+00 : f32
      %14 = vector.broadcast %cst_12 : f32 to vector<16x32xf32>
      %c0_13 = arith.constant 0 : index
      %c0_14 = arith.constant 0 : index
      %15 = vector.load %arg8[%c0_13, %c0_14] : memref<16x32xf32, #tpu.memory_space<vmem>>, vector<16x32xf32>
      tpu.vector_store %arg8[%c0_13, %c0_14], %14 {strides = array<i32>} : memref<16x32xf32, #tpu.memory_space<vmem>>, vector<16x32xf32>,
    } else {
    }
    %c0 = arith.constant 0 : index
    %c0_1 = arith.constant 0 : index
    %3 = vector.load %arg8[%c0, %c0_1] : memref<16x32xf32, #tpu.memory_space<vmem>>, vector<16x32xf32>
    %c0_2 = arith.constant 0 : index
    %c0_3 = arith.constant 0 : index
    %c0_4 = arith.constant 0 : index
    %4 = vector.load %arg4[%c0_2, %c0_3, %c0_4] : memref<1x16x32xbf16, #tpu.memory_space<vmem>>, vector<1x16x32xbf16>
    %5 = vector.shape_cast %4 : vector<1x16x32xbf16> to vector<16x32xbf16>
    %c0_5 = arith.constant 0 : index
    %c0_6 = arith.constant 0 : index
    %c0_7 = arith.constant 0 : index
    %6 = vector.load %arg5[%c0_5, %c0_6, %c0_7] : memref<1x32x32xbf16, #tpu.memory_space<vmem>>, vector<1x32x32xbf16>
    %7 = vector.shape_cast %6 : vector<1x32x32xbf16> to vector<32x32xbf16>
    %cst = arith.constant dense<0.000000e+00> : vector<16x32xf32>
    %8 = tpu.matmul %5, %7, %cst {dimension_numbers = #tpu.dot_dimension_numbers<[1], [0], [0], [1], [0, 0, 1, 1], [], []>} : vector<16x32xbf16>, vector<32x32xbf16>, vector<16x32xf32> -> vector<16x32xf32>
    %9 = arith.addf %3, %8 : vector<16x32xf32>
    %c0_8 = arith.constant 0 : index
    %c0_9 = arith.constant 0 : index
    %10 = vector.load %arg8[%c0_8, %c0_9] : memref<16x32xf32, #tpu.memory_space<vmem>>, vector<16x32xf32>
    tpu.vector_store %arg8[%c0_8, %c0_9], %9 {strides = array<i32>} : memref<16x32xf32, #tpu.memory_space<vmem>>, vector<16x32xf32>,
    %c0_i32_10 = arith.constant 0 : i32
    %11 = arith.cmpi eq, %arg3, %c0_i32_10 : i32
    %12 = arith.extui %11 : i1 to i32
    %c0_i32_11 = arith.constant 0 : i32
    %13 = arith.cmpi ne, %12, %c0_i32_11 : i32
    scf.if %13 {
      %c0_12 = arith.constant 0 : index
      %c0_13 = arith.constant 0 : index
      %14 = vector.load %arg8[%c0_12, %c0_13] : memref<16x32xf32, #tpu.memory_space<vmem>>, vector<16x32xf32>
      %c0_14 = arith.constant 0 : index
      %c0_15 = arith.constant 0 : index
      %c0_16 = arith.constant 0 : index
      %15 = vector.load %arg6[%c0_14, %c0_15, %c0_16] : memref<1x1x32xf32, #tpu.memory_space<vmem>>, vector<1x1x32xf32>
      %16 = vector.shape_cast %15 : vector<1x1x32xf32> to vector<1x32xf32>
      %17 = vector.broadcast %16 : vector<1x32xf32> to vector<16x32xf32>
      %18 = arith.addf %14, %17 : vector<16x32xf32>
      %19 = arith.truncf %18 : vector<16x32xf32> to vector<16x32xbf16>
      %c0_17 = arith.constant 0 : index
      %c0_18 = arith.constant 0 : index
      %c0_19 = arith.constant 0 : index
      %20 = vector.load %arg7[%c0_17, %c0_18, %c0_19] : memref<1x16x32xbf16, #tpu.memory_space<vmem>>, vector<1x16x32xbf16>
      %21 = vector.shape_cast %20 : vector<1x16x32xbf16> to vector<16x32xbf16>
      %22 = vector.shape_cast %19 : vector<16x32xbf16> to vector<1x16x32xbf16>
      tpu.vector_store %arg7[%c0_17, %c0_18, %c0_19], %22 {strides = array<i32>} : memref<1x16x32xbf16, #tpu.memory_space<vmem>>, vector<1x16x32xbf16>,
    } else {
    }
    return
  }
  func.func @transform_0(%arg0: i32, %arg1: i32, %arg2: i32, %arg3: i32) -> (i32, i32, i32) {
    %c0_i32 = arith.constant 0 : i32
    return %arg0, %arg1, %arg3 : i32, i32, i32
  }
  func.func @transform_1(%arg0: i32, %arg1: i32, %arg2: i32, %arg3: i32) -> (i32, i32, i32) {
    %c0_i32 = arith.constant 0 : i32
    return %arg0, %arg3, %arg2 : i32, i32, i32
  }
  func.func @transform_2(%arg0: i32, %arg1: i32, %arg2: i32, %arg3: i32) -> (i32, i32, i32) {
    %c0_i32 = arith.constant 0 : i32
    %c0_i32_0 = arith.constant 0 : i32
    return %arg0, %c0_i32, %arg2 : i32, i32, i32
  }
  func.func @transform_3(%arg0: i32, %arg1: i32, %arg2: i32, %arg3: i32) -> (i32, i32, i32) {
    %c0_i32 = arith.constant 0 : i32
    return %arg0, %arg1, %arg2 : i32, i32, i32
  }
}

</mosaic_0001>

<llo_original>
// kernel: tpu_custom_call.1
$region0: #{tpu_custom_call.1}
  #allocation0 [shape = 'u32[]', space=smem, size = 0x4, offset = 0x4, fixed_abs, tag = 'smem constant byte address 0x4 - core index']
  #allocation1 [shape = 'u32[144,128]{1,0:T(1,128)}', space=vmem, size = 0x12000, scoped, tag = 'internal scratch']
  #allocation2 [shape = 'f32[16,32]{1,0:T(8,128)}', space=vmem, size = 0x2000, scoped, tag = 'scratch operand']
  %s0 = inlined_call_operand.hbm [shape: bf16[3,16,32], index: 0, kind: input, shape index: {}]
  %s1 = inlined_call_operand.hbm [shape: bf16[3,32,32], index: 1, kind: input, shape index: {}]
  %s2 = inlined_call_operand.vmem [shape: f32[3,1,32], index: 2, kind: input, shape index: {}]
  %s3 = inlined_call_operand.hbm [shape: bf16[3,16,32], index: 3, kind: output, shape index: {}]
  %s4 = sld [smem:[#allocation0]]
  $region61: #{tpu_custom_call.1} parent=0
    _
  %s6 = ssub.s32 1, %s4
  %s7 = scalar_select 0, %s6, %s4
  $region1: #{tpu_custom_call.1} parent=0
    #allocation3 [shape = 'u8[8192]{0}', space=vmem, size = 0x2000, scoped, tag = 'input window, operand 0']
    #allocation4 [shape = 's32[2]{0}', space=sflag, size = 0x8, scoped, tag = 'scoped memory for tpu_custom_call.1']
    #allocation5 [shape = 's32[2]{0}', space=sflag, size = 0x8, scoped, tag = 'scoped memory for tpu_custom_call.1']
    #allocation6 [shape = 'u8[16384]{0}', space=vmem, size = 0x4000, scoped, tag = 'input window, operand 1']
    #allocation7 [shape = 's32[2]{0}', space=sflag, size = 0x8, scoped, tag = 'scoped memory for tpu_custom_call.1']
    #allocation8 [shape = 'u8[8192]{0}', space=vmem, size = 0x2000, scoped, tag = 'output window, operand 0']
    %8 = vsyncpa [#allocation4], 0
    %s9 = scalar_lea.sflag [#allocation4], 1
    %10 = vsyncpa %s9, 0
    %11 = vsyncpa [#allocation7], 0
    %s12 = scalar_lea.sflag [#allocation7], 1
    %13 = vsyncpa %s12, 0
    %14 = vsyncpa [#allocation5], 0
    %s15 = scalar_lea.sflag [#allocation5], 1
    %16 = vsyncpa %s15, 0
    loop: start=0, step=1, limit=5
    $region2: #{tpu_custom_call.1} parent=1 // loop_pre_header
      _
    $region3: #{tpu_custom_call.1} parent=1 // loop_header
      %s18 = sphi 0, %s22
      %p19 = scmp.ge.s32.totalorder %s18, 5
      %s25 = sphi 0, %s51
      %s26 = sphi 0, %s47
      %s27 = sphi 0, %s43
      %s28 = sphi 0, %s39
      %s29 = sphi 0, %s25
      %s30 = sphi 0, %s26
      %s31 = sphi 0, %s27
      %s32 = sphi 0, %s28
      %s33 = sphi 0, %s29
      %s34 = sphi 0, %s30
      %s35 = sphi 0, %s31
      %s36 = sphi 0, %s32
      %s58 = sphi 0, %s60
      %s61 = sphi 0, %s58
      %s62 = sphi 0, %s61
      %s78 = sphi 0, %s62
      %s88 = sphi 0, %s90
      %s91 = sphi 0, %s88
      %s92 = sphi 0, %s91
      %s108 = sphi 0, %s92
      %s116 = sphi 0, %s118
      %s119 = sphi 0, %s116
      %s120 = sphi 0, %s119
      %s136 = sphi 0, %s120
      %s146 = sphi 0, %s148
      %s149 = sphi 0, %s146
      %s150 = sphi 0, %s149
      %s166 = sphi 0, %s150
    $region4: #{tpu_custom_call.1} parent=1 // loop_header_branch
      %21 = sbr.rel (%p19) target = $region8
    $region5: #{tpu_custom_call.1} parent=1 // loop_body
      %s23 = ssub.s32 %s18, 1
      %s24 = ssub.s32 %s18, 2
      %s37 = sadd.s32 1, %s28
      %p38 = scmp.ge.s32.totalorder %s37, 1
      %s39 = scalar_select %p38, 0, %s37
      %s40 = sadd.s32 1, %s27
      %s41 = scalar_select %p38, %s40, %s27
      %p42 = scmp.ge.s32.totalorder %s41, 1
      %s43 = scalar_select %p42, 0, %s41
      %s44 = sadd.s32 1, %s26
      %s45 = scalar_select %p42, %s44, %s26
      %p46 = scmp.ge.s32.totalorder %s45, 1
      %s47 = scalar_select %p46, 0, %s45
      %s48 = sadd.s32 1, %s25
      %s49 = scalar_select %p46, %s48, %s25
      %p50 = scmp.ge.s32.totalorder %s49, 3
      %s51 = scalar_select %p50, 0, %s49
      %s52 = ssub.s32 %s25, %s51
      %s53 = ssub.s32 %s26, %s47
      %s54 = sor.u32 %s52, %s53
      %s55 = ssub.s32 %s28, %s39
      %s56 = sor.u32 %s54, %s55
      %p57 = scmp.eq.s32.totalorder %s56, 0
      %s59 = sadd.s32 %s58, 1
      %s60 = scalar_select %p57, %s58, %s59
      %p63 = pneg %p57
      %p64 = scmp.eq.s32.totalorder %s18, 2
      %p65 = por %p63, %p64
      %p66 = scmp.ne.s32.totalorder %s58, %s61
      %p67 = scmp.eq.s32.totalorder %s18, 0
      %p68 = por %p66, %p67
      %p69 = scmp.ne.s32.totalorder %s58, %s61
      %p70 = scmp.eq.s32.totalorder %s23, 2
      %p71 = por %p69, %p70
      %p72 = scmp.ne.s32.totalorder %s61, %s62
      %p73 = scmp.eq.s32.totalorder %s23, 0
      %p74 = por %p72, %p73
      %p75 = scmp.ne.s32.totalorder %s61, %s62
      %p76 = scmp.eq.s32.totalorder %s24, 2
      %p77 = por %p75, %p76
      %p79 = scmp.ne.s32.totalorder %s62, %s78
      %p80 = scmp.eq.s32.totalorder %s24, 0
      %p81 = por %p79, %p80
      %s82 = ssub.s32 %s25, %s51
      %s83 = ssub.s32 %s28, %s39
      %s84 = sor.u32 %s82, %s83
      %s85 = ssub.s32 %s27, %s43
      %s86 = sor.u32 %s84, %s85
      %p87 = scmp.eq.s32.totalorder %s86, 0
      %s89 = sadd.s32 %s88, 1
      %s90 = scalar_select %p87, %s88, %s89
      %p93 = pneg %p87
      %p94 = scmp.eq.s32.totalorder %s18, 2
      %p95 = por %p93, %p94
      %p96 = scmp.ne.s32.totalorder %s88, %s91
      %p97 = scmp.eq.s32.totalorder %s18, 0
      %p98 = por %p96, %p97
      %p99 = scmp.ne.s32.totalorder %s88, %s91
      %p100 = scmp.eq.s32.totalorder %s23, 2
      %p101 = por %p99, %p100
      %p102 = scmp.ne.s32.totalorder %s91, %s92
      %p103 = scmp.eq.s32.totalorder %s23, 0
      %p104 = por %p102, %p103
      %p105 = scmp.ne.s32.totalorder %s91, %s92
      %p106 = scmp.eq.s32.totalorder %s24, 2
      %p107 = por %p105, %p106
      %p109 = scmp.ne.s32.totalorder %s92, %s108
      %p110 = scmp.eq.s32.totalorder %s24, 0
      %p111 = por %p109, %p110
      %s112 = ssub.s32 %s25, %s51
      %s113 = ssub.s32 %s27, %s43
      %s114 = sor.u32 %s112, %s113
      %p115 = scmp.eq.s32.totalorder %s114, 0
      %s117 = sadd.s32 %s116, 1
      %s118 = scalar_select %p115, %s116, %s117
      %p121 = pneg %p115
      %p122 = scmp.eq.s32.totalorder %s18, 2
      %p123 = por %p121, %p122
      %p124 = scmp.ne.s32.totalorder %s116, %s119
      %p125 = scmp.eq.s32.totalorder %s18, 0
      %p126 = por %p124, %p125
      %p127 = scmp.ne.s32.totalorder %s116, %s119
      %p128 = scmp.eq.s32.totalorder %s23, 2
      %p129 = por %p127, %p128
      %p130 = scmp.ne.s32.totalorder %s119, %s120
      %p131 = scmp.eq.s32.totalorder %s23, 0
      %p132 = por %p130, %p131
      %p133 = scmp.ne.s32.totalorder %s119, %s120
      %p134 = scmp.eq.s32.totalorder %s24, 2
      %p135 = por %p133, %p134
      %p137 = scmp.ne.s32.totalorder %s120, %s136
      %p138 = scmp.eq.s32.totalorder %s24, 0
      %p139 = por %p137, %p138
      %s140 = ssub.s32 %s25, %s51
      %s141 = ssub.s32 %s26, %s47
      %s142 = sor.u32 %s140, %s141
      %s143 = ssub.s32 %s27, %s43
      %s144 = sor.u32 %s142, %s143
      %p145 = scmp.eq.s32.totalorder %s144, 0
      %s147 = sadd.s32 %s146, 1
      %s148 = scalar_select %p145, %s146, %s147
      %p151 = pneg %p145
      %p152 = scmp.eq.s32.totalorder %s18, 2
      %p153 = por %p151, %p152
      %p154 = scmp.ne.s32.totalorder %s146, %s149
      %p155 = scmp.eq.s32.totalorder %s18, 0
      %p156 = por %p154, %p155
      %p157 = scmp.ne.s32.totalorder %s146, %s149
      %p158 = scmp.eq.s32.totalorder %s23, 2
      %p159 = por %p157, %p158
      %p160 = scmp.ne.s32.totalorder %s149, %s150
      %p161 = scmp.eq.s32.totalorder %s23, 0
      %p162 = por %p160, %p161
      %p163 = scmp.ne.s32.totalorder %s149, %s150
      %p164 = scmp.eq.s32.totalorder %s24, 2
      %p165 = por %p163, %p164
      %p167 = scmp.ne.s32.totalorder %s150, %s166
      %p168 = scmp.eq.s32.totalorder %s24, 0
      %p169 = por %p167, %p168
      %p170 = scmp.le.s32.totalorder 1, %s18
      %p171 = scmp.lt.s32.totalorder %s18, 4
      %p172 = pnand %p170, %p171
      %p173 = pneg %p172
      // Predicated region
      $region9: #{tpu_custom_call.1} parent=5 // pred_check
        _
      $region10: #{tpu_custom_call.1} parent=5 // pred_check_branch
        %175 = sbr.rel (%p172) target = $region12
      $region11: #{tpu_custom_call.1} parent=5 // pred_region
        %s176 = ssub.s32 %s18, 1
      $region12: #{tpu_custom_call.1} parent=5 // pred_fallthru
        _
      %p177 = scmp.lt.s32.totalorder %s18, 3
      // Predicated region
      $region13: #{tpu_custom_call.1} parent=5 // pred_check
        %p178 = pneg %p177
      $region14: #{tpu_custom_call.1} parent=5 // pred_check_branch
        %180 = sbr.rel (%p178) target = $region16
      $region15: #{tpu_custom_call.1} parent=5 // pred_region
        // Predicated region
        $region17: #{tpu_custom_call.1} parent=15 // pred_check
          %p181 = pneg %p68
        $region18: #{tpu_custom_call.1} parent=15 // pred_check_branch
          %183 = sbr.rel (%p181) target = $region20
        $region19: #{tpu_custom_call.1} parent=15 // pred_region
          %s184 = sand.u32 %s58, 1
          %s185 = scalar_lea.sflag [#allocation4], %s184
          %s186 = sand.u32 %s58, 1
          %s187 = smul.addr %s186, 8
          %s188 = scalar_lea.vmem [#allocation3], %s187
          %s189 = smul.u32 2, %s26
          %s191 = ssub.s32 128, 128
          %192 = vsyncadd %s185, %s191
          %s193 = sadd.s32 %s28, %s189
          %s194 = smul.addr %s25, 2
          %s195 = sadd.s32 %s193, %s194
          %s196 = smul.addr %s195, 64
          %s197 = scalar_lea.hbm %s0, %s196
          %s198 = sshll.u32 %s188, 4
          %s199 = int_to_ptr.vmem [resolvable:$true] %s198
          %204 = dma.hbm_to_vmem [thread:$0]  %s197, 128, %s199, %s185, 64, 64, 4
        $region20: #{tpu_custom_call.1} parent=15 // pred_fallthru
          _
        // Predicated region
        $region21: #{tpu_custom_call.1} parent=15 // pred_check
          %p205 = pneg %p98
        $region22: #{tpu_custom_call.1} parent=15 // pred_check_branch
          %207 = sbr.rel (%p205) target = $region24
        $region23: #{tpu_custom_call.1} parent=15 // pred_region
          %s208 = sand.u32 %s88, 1
          %s209 = scalar_lea.sflag [#allocation7], %s208
          %s210 = sand.u32 %s88, 1
          %s211 = smul.addr %s210, 16
          %s212 = scalar_lea.vmem [#allocation6], %s211
          %s213 = smul.u32 4, %s28
          %s215 = ssub.s32 256, 256
          %216 = vsyncadd %s209, %s215
          %s217 = sadd.s32 %s27, %s213
          %s218 = smul.addr %s25, 4
          %s219 = sadd.s32 %s217, %s218
          %s220 = smul.addr %s219, 64
          %s221 = scalar_lea.hbm %s1, %s220
          %s222 = sshll.u32 %s212, 4
          %s223 = int_to_ptr.vmem [resolvable:$true] %s222
          %228 = dma.hbm_to_vmem [thread:$0]  %s221, 256, %s223, %s209, 64, 64, 4
        $region24: #{tpu_custom_call.1} parent=15 // pred_fallthru
          _
        // Predicated region
        $region25: #{tpu_custom_call.1} parent=15 // pred_check
          %p229 = pneg %p126
        $region26: #{tpu_custom_call.1} parent=15 // pred_check_branch
          %231 = sbr.rel (%p229) target = $region28
        $region27: #{tpu_custom_call.1} parent=15 // pred_region
          %p232 = scmp.lt.s32.totalorder %s25, 2
          %s233 = scalar_select %p232, %s25, 2
          %p234 = scmp.lt.s32.totalorder %s27, 0
          %s235 = scalar_select %p234, %s27, 0
          %s236 = sadd.s32 %s235, %s233
          %s237 = scalar_lea.vmem %s2, %s236
        $region28: #{tpu_custom_call.1} parent=15 // pred_fallthru
          _
      $region16: #{tpu_custom_call.1} parent=5 // pred_fallthru
        _
      %p238 = scmp.le.s32.totalorder 1, %s18
      %p239 = scmp.lt.s32.totalorder %s18, 4
      %p240 = pnand %p238, %p239
      %p241 = pneg %p240
      // Predicated region
      $region29: #{tpu_custom_call.1} parent=5 // pred_check
        _
      $region30: #{tpu_custom_call.1} parent=5 // pred_check_branch
        %243 = sbr.rel (%p240) target = $region32
      $region31: #{tpu_custom_call.1} parent=5 // pred_region
        %s244 = ssub.s32 %s18, 1
        %s245 = sand.u32 %s61, 1
        %s246 = scalar_lea.sflag [#allocation4], %s245
        %s247 = sand.u32 %s61, 1
        %s248 = smul.addr %s247, 8
        %s249 = scalar_lea.vmem [#allocation3], %s248
        // Predicated region
        $region33: #{tpu_custom_call.1} parent=31 // pred_check
          %p250 = pneg %p74
        $region34: #{tpu_custom_call.1} parent=31 // pred_check_branch
          %252 = sbr.rel (%p250) target = $region36
        $region35: #{tpu_custom_call.1} parent=31 // pred_region
          %253 = dma.done %s246, 128
        $region36: #{tpu_custom_call.1} parent=31 // pred_fallthru
          _
        %s254 = sand.u32 %s91, 1
        %s255 = scalar_lea.sflag [#allocation7], %s254
        %s256 = sand.u32 %s91, 1
        %s257 = smul.addr %s256, 16
        %s258 = scalar_lea.vmem [#allocation6], %s257
        // Predicated region
        $region37: #{tpu_custom_call.1} parent=31 // pred_check
          %p259 = pneg %p104
        $region38: #{tpu_custom_call.1} parent=31 // pred_check_branch
          %261 = sbr.rel (%p259) target = $region40
        $region39: #{tpu_custom_call.1} parent=31 // pred_region
          %262 = dma.done %s255, 256
        $region40: #{tpu_custom_call.1} parent=31 // pred_fallthru
          _
        %s263 = sand.u32 %s61, 1
        %s264 = scalar_lea.sflag [#allocation4], %s263
        %s265 = sand.u32 %s61, 1
        %s266 = smul.addr %s265, 8
        %s267 = scalar_lea.vmem [#allocation3], %s266
        %p268 = pneg %p74
        %p269 = pneg %p71
        %s270 = sand.u32 %s91, 1
        %s271 = scalar_lea.sflag [#allocation7], %s270
        %s272 = sand.u32 %s91, 1
        %s273 = smul.addr %s272, 16
        %s274 = scalar_lea.vmem [#allocation6], %s273
        %p275 = pneg %p104
        %p276 = pneg %p101
        %p277 = scmp.lt.s32.totalorder %s29, 2
        %s278 = scalar_select %p277, %s29, 2
        %p279 = scmp.lt.s32.totalorder %s31, 0
        %s280 = scalar_select %p279, %s31, 0
        %s281 = sadd.s32 %s280, %s278
        %s282 = scalar_lea.vmem %s2, %s281
        %p283 = pneg %p132
        %p284 = pneg %p129
        %p285 = pneg %p162
        %p286 = pneg %p159
        %s287 = sand.u32 %s149, 1
        %s288 = scalar_lea.sflag [#allocation5], %s287
        %s289 = sand.u32 %s149, 1
        %s290 = smul.addr %s289, 8
        %s291 = scalar_lea.vmem [#allocation8], %s290
        %s292 = smul.u32 2, %s30
        %s293 = smul.u32 4, %s32
        %p294 = scmp.lt.s32.totalorder %s29, 2
        %s295 = scalar_select %p294, %s29, 2
        %p296 = scmp.lt.s32.totalorder %s31, 0
        %s297 = scalar_select %p296, %s31, 0
        %s298 = sadd.s32 %s297, %s295
        %s299 = scalar_lea.vmem %s2, %s298
        %s300 = smul.u32 2, %s30
        %p302 = scmp.eq.s32.totalorder %s32, 0
        // Predicated region
        $region41: #{tpu_custom_call.1} parent=31 // pred_check
          %p303 = pneg %p302
        $region42: #{tpu_custom_call.1} parent=31 // pred_check_branch
          %305 = sbr.rel (%p303) target = $region44
        $region43: #{tpu_custom_call.1} parent=31 // pred_region
          %vm306 = vcmask 261120
          %307 = vst.msk [vmem:[#allocation2] sm:$0xff] %vm306, 0.0
          %308 = vst.msk [vmem:[#allocation2 + $0x8] sm:$0xff] %vm306, 0.0
        $region44: #{tpu_custom_call.1} parent=31 // pred_fallthru
          _
        %v309 = vld [vmem:[#allocation2] sm:$0xff]
        %v310 = vld [vmem:[#allocation2 + $0x8] sm:$0xff]
        %v311 = vld [vmem:[%s249] sm:$0xf]
        %v312 = vld [vmem:[%s249 + $0x4] sm:$0xf]
        %v313 = vld [vmem:[%s258] sm:$0xf]
        %v314 = vld [vmem:[%s258 + $0x4] sm:$0xf]
        %v315 = vld [vmem:[%s258 + $0x8] sm:$0xf]
        %v316 = vld [vmem:[%s258 + $0xc] sm:$0xf]
        %v319 = vunpack.c.l.b16 %v311
        %v320 = vunpack.c.l.b16 %v312
        %v321 = vpack.c.b16 %v320, %v319
        %v326 = vunpack.c.l.b16 %v313
        %v327 = vunpack.c.l.b16 %v314
        %v328 = vunpack.c.l.b16 %v315
        %v329 = vunpack.c.l.b16 %v316
        %v330 = vpack.c.b16 %v327, %v326
        %v331 = vpack.c.b16 %v329, %v328
        %vm334 = vcmask 261120
        %v336 = vsel %vm334, %v321, 0
        %338 = vmatprep.subr.bf16.mxu0 0
        %339 = vmatpush1.bf16.msra.mxu0 0
        %340 = vmatprep.subr.bf16.mxu0 0
        %341 = vmatpush1.bf16.msra.mxu0 0
        %342 = vmatprep.subr.bf16.mxu0 0
        %343 = vmatpush1.bf16.msra.mxu0 0
        %344 = vmatprep.subr.bf16.mxu0 0
        %345 = vmatpush1.bf16.msra.mxu0 0
        %346 = vmatprep.subr.bf16.mxu0 0
        %347 = vmatpush1.bf16.msra.mxu0 0
        %348 = vmatprep.subr.bf16.mxu0 0
        %349 = vmatpush1.bf16.msra.mxu0 0
        %350 = vmatprep.subr.bf16.mxu0 0
        %351 = vmatpush1.bf16.msra.mxu0 %v331
        %352 = vmatprep.subr.bf16.mxu0 0
        %353 = vmatpush1.bf16.msra.mxu0 %v330
        %354 = vmatprep.subr.bf16.mxu0 0
        %355 = vmatpush2.bf16.msra.mxu0 0
        %356 = vmatprep.subr.bf16.mxu0 0
        %357 = vmatpush2.bf16.msra.mxu0 0
        %358 = vmatprep.subr.bf16.mxu0 0
        %359 = vmatpush2.bf16.msra.mxu0 0
        %360 = vmatprep.subr.bf16.mxu0 0
        %361 = vmatpush2.bf16.msra.mxu0 0
        %362 = vmatprep.subr.bf16.mxu0 0
        %363 = vmatpush2.bf16.msra.mxu0 0
        %364 = vmatprep.subr.bf16.mxu0 0
        %365 = vmatpush2.bf16.msra.mxu0 0
        %366 = vmatprep.subr.bf16.mxu0 0
        %367 = vmatpush2.bf16.msra.mxu0 0
        %368 = vmatprep.subr.bf16.mxu0 0
        %369 = vmatpush2.bf16.msra.mxu0 0
        %370 = vmatprep.mubr.bf16.mxu0 0
        %371 = vmatmul.mubr.bf16.gmra.mxu0 %v336
        %v372 = vpop.f32.mrf.mxu0
        %v373 = vadd.f32 0.0, %v372
        %v374 = vpop.f32.mrf.mxu0
        %v375 = vpop.f32.mrf.mxu0
        %v376 = vadd.f32 0.0, %v375
        %v377 = vpop.f32.mrf.mxu0
        %378 = vdwg.mxu0
        %v379 = vadd.f32 %v309, %v373
        %v380 = vadd.f32 %v310, %v376
        %381 = vst.msk [vmem:[#allocation2] sm:$0xff] %vm334, %v379
        %382 = vst.msk [vmem:[#allocation2 + $0x8] sm:$0xff] %vm334, %v380
        // Predicated region
        $region45: #{tpu_custom_call.1} parent=31 // pred_check
          %p383 = pneg %p302
        $region46: #{tpu_custom_call.1} parent=31 // pred_check_branch
          %385 = sbr.rel (%p383) target = $region48
        $region47: #{tpu_custom_call.1} parent=31 // pred_region
          %v386 = vld [vmem:[#allocation2] sm:$0xff]
          %v387 = vld [vmem:[#allocation2 + $0x8] sm:$0xff]
          %v388 = vld [vmem:[%s299] sm:$0x1]
          %v390 = vlaneseq
          %v391 = vshrl.u32 %v390, 7
          %v392 = vsub.s32 0, %v391
          %v393 = vrot.slane %v388, %v392
          %v395 = vadd.f32 %v386, %v393
          %v396 = vadd.f32 %v387, %v393
          %v397 = vpack.c.bf16 %v396, %v395
          %v399 = vunpack.c.l.b16 %v397
          %v400 = vunpack.c.h.b16 %v397
          %v401 = vpack.c.b16 %v399, %v399
          %v402 = vpack.c.b16 %v400, %v400
          %vm405 = vcmask 257024
          %406 = vst.msk [vmem:[%s291] sm:$0xf] %vm405, %v401
          %407 = vst.msk [vmem:[%s291 + $0x4] sm:$0xf] %vm405, %v402
        $region48: #{tpu_custom_call.1} parent=31 // pred_fallthru
          _
        %s408 = sand.u32 %s149, 1
        %s409 = scalar_lea.sflag [#allocation5], %s408
        %s410 = sand.u32 %s149, 1
        %s411 = smul.addr %s410, 8
        %s412 = scalar_lea.vmem [#allocation8], %s411
        // Predicated region
        $region49: #{tpu_custom_call.1} parent=31 // pred_check
          %p413 = pneg %p159
        $region50: #{tpu_custom_call.1} parent=31 // pred_check_branch
          %415 = sbr.rel (%p413) target = $region52
        $region51: #{tpu_custom_call.1} parent=31 // pred_region
          %s416 = smul.u32 2, %s30
          %s418 = ssub.s32 128, 128
          %419 = vsyncadd %s409, %s418
          %s420 = sadd.s32 %s31, %s416
          %s421 = smul.addr %s29, 2
          %s422 = sadd.s32 %s420, %s421
          %s423 = smul.addr %s422, 64
          %s424 = scalar_lea.hbm %s3, %s423
          %s425 = sshll.u32 %s412, 4
          %s426 = int_to_ptr.vmem [resolvable:$true] %s425
          %431 = dma.vmem_to_hbm [thread:$0]  %s426, 128, %s424, %s409, 64, 64, 4
        $region52: #{tpu_custom_call.1} parent=31 // pred_fallthru
          _
      $region32: #{tpu_custom_call.1} parent=5 // pred_fallthru
        _
      %p432 = scmp.le.s32.totalorder 2, %s18
      // Predicated region
      $region53: #{tpu_custom_call.1} parent=5 // pred_check
        %p433 = pneg %p432
      $region54: #{tpu_custom_call.1} parent=5 // pred_check_branch
        %435 = sbr.rel (%p433) target = $region56
      $region55: #{tpu_custom_call.1} parent=5 // pred_region
        %s436 = ssub.s32 %s18, 2
        // Predicated region
        $region57: #{tpu_custom_call.1} parent=55 // pred_check
          %p437 = pneg %p165
        $region58: #{tpu_custom_call.1} parent=55 // pred_check_branch
          %439 = sbr.rel (%p437) target = $region60
        $region59: #{tpu_custom_call.1} parent=55 // pred_region
          %s440 = sand.u32 %s150, 1
          %s441 = scalar_lea.sflag [#allocation5], %s440
          %s442 = sand.u32 %s150, 1
          %s443 = smul.addr %s442, 8
          %s444 = scalar_lea.vmem [#allocation8], %s443
          %445 = dma.done %s441, 128
        $region60: #{tpu_custom_call.1} parent=55 // pred_fallthru
          _
      $region56: #{tpu_custom_call.1} parent=5 // pred_fallthru
        _
    $region6: #{tpu_custom_call.1} parent=1 // loop_footer
      %s22 = sadd.s32 1, %s18
    $region7: #{tpu_custom_call.1} parent=1 // loop_footer_branch
      %17 = sbr.rel target = $region3
    $region8: #{tpu_custom_call.1} parent=1 // loop_exit
      _
    %446 = vsyncpa [#allocation4], 1
    %s447 = scalar_lea.sflag [#allocation4], 1
    %448 = vsyncpa %s447, 1
    %449 = vsyncpa [#allocation7], 1
    %s450 = scalar_lea.sflag [#allocation7], 1
    %451 = vsyncpa %s450, 1
    %452 = vsyncpa [#allocation5], 1
    %s453 = scalar_lea.sflag [#allocation5], 1
    %454 = vsyncpa %s453, 1

</llo_original>
